<compile_context>
chip_gen: v7x
topology: tpu7x:2x2x1
jax: 0.10.0
libtpu: 0.0.40
codegen_flags: <defaults>
</compile_context>

<pallas_src>
import functools
import math

import jax
import jax.numpy as jnp
from jax import lax
from jax.experimental import pallas as pl
from jax.experimental.pallas import tpu as pltpu

LANE = 128
SUBLANE = 8
BCE_WEIGHT = 0.5
DICE_WEIGHT = 0.5
EPS = 1e-6
_TEMP_BYTES = 256 * 1024           # budget for each in-kernel f32 chunk temporary
_ROW_CAP = 2048                    # max rows after the sublane fold


def _round_up(a, b):
    return (a + b - 1) // b * b


def _divisors(n):
    small, large = [], []
    i = 1
    while i * i <= n:
        if n % i == 0:
            small.append(i)
            if i != n // i:
                large.append(n // i)
        i += 1
    return small + large[::-1]      # ascending


def _pick_sublane_fold(n, d):
    """Pick S | d so the (n*S, d/S) view fills vreg sublanes and keeps >=128
    lanes per row; prefers lane-aligned rows and a chunkable row count."""
    best_s, best_key = 1, None
    for s in _divisors(d):
        rows, dr = n * s, d // s
        if rows > _ROW_CAP:
            break
        if dr < min(d, LANE):
            continue
        key = (rows % SUBLANE == 0,     # full vreg sublanes
               dr % LANE == 0,          # no ragged lane tail at all
               rows >= 2 * SUBLANE,     # enables in-kernel row chunking
               -abs(rows - 256))        # moderate row count
        if best_key is None or key > best_key:
            best_s, best_key = s, key
    return best_s


def _pick_row_chunk(rows, td):
    """Largest multiple-of-8 divisor of rows whose (rc, td) f32 chunk stays
    inside the temporaries budget; rows itself when it cannot be chunked."""
    if rows <= SUBLANE or rows % SUBLANE != 0:
        return rows
    cap = max(SUBLANE, (_TEMP_BYTES // (td * 4)) // SUBLANE * SUBLANE)
    best = SUBLANE
    for rc in range(SUBLANE, rows + 1, SUBLANE):
        if rows % rc == 0 and rc <= cap:
            best = rc
    return best


def _default_num_core_splits():
    """2 only on chips with two TensorCores per chip (v7x); 1 on v5e / v6e."""
    try:
        kind = jax.devices()[0].device_kind.lower()
    except Exception:
        return 1
    return 2 if ("v7" in kind or "tpu7" in kind) else 1


def _default_vmem_limit_bytes():
    """Generation-aware scoped-VMEM budget, clamped to a safe range."""
    try:
        cap = int(pltpu.get_tpu_info().vmem_capacity_bytes)
        return int(min(max(cap // 2, 16 * 1024 * 1024), 64 * 1024 * 1024))
    except Exception:
        return 32 * 1024 * 1024


def _bce_dice_partial_kernel(x_ref, t_ref, bce_ref, inter_ref, uni_ref, *,
                             kt, td, rc, d_valid, ragged, approx_sigmoid):
    """Accumulate per-row BCE / intersection / union partial sums (folded to
    128 lanes) for one (ROWS, td) column tile.  The outputs are revisited
    across the 'arbitrary' k axis (accumulator pattern, init at k == 0)."""
    c = pl.program_id(0)
    k = pl.program_id(1)

    @pl.when(k == 0)
    def _init():
        bce_ref[...] = jnp.zeros_like(bce_ref)
        inter_ref[...] = jnp.zeros_like(inter_ref)
        uni_ref[...] = jnp.zeros_like(uni_ref)

    rows = x_ref.shape[0]
    n_rc = rows // rc
    nb = td // LANE
    col0 = (c * kt + k) * td              # first global column of this tile

    def partials(x_raw, t_raw, masked):
        x = x_raw.astype(jnp.float32)
        t = t_raw.astype(jnp.float32)
        if masked:
            col = col0 + lax.broadcasted_iota(jnp.int32, x.shape, 1)
            valid = col < d_valid
            # Mask BEFORE exp/log: out-of-range tail contents are undefined.
            x = jnp.where(valid, x, 0.0)
            t = jnp.where(valid, t, 0.0)
        e = jnp.exp(-jnp.abs(x))                                # shared EUP op
        bce = jnp.maximum(x, 0.0) - x * t + jnp.log1p(e)        # stable BCE-with-logits
        num = jnp.where(x >= 0.0, 1.0, e)                       # stable sigmoid
        if approx_sigmoid:
            sig = num * pl.reciprocal(1.0 + e, approx=True)     # v5e EUP relief
        else:
            sig = num / (1.0 + e)
        if masked:
            # x = t = 0 padding still yields bce = log(2), sig = 0.5 -> zero them.
            bce = jnp.where(valid, bce, 0.0)
            sig = jnp.where(valid, sig, 0.0)
        inter = sig * t
        uni = sig + t
        # Static 128-lane fold (pure VPU adds, no per-step XLU reduction).
        bce_p, inter_p, uni_p = bce[:, :LANE], inter[:, :LANE], uni[:, :LANE]
        for j in range(1, nb):
            sl = slice(j * LANE, (j + 1) * LANE)
            bce_p = bce_p + bce[:, sl]
            inter_p = inter_p + inter[:, sl]
            uni_p = uni_p + uni[:, sl]
        return bce_p, inter_p, uni_p

    def accumulate(masked):
        if n_rc == 1:
            bp, ip, up = partials(x_ref[...], t_ref[...], masked)
            bce_ref[...] += bp
            inter_ref[...] += ip
            uni_ref[...] += up
        else:
            def row_chunk(i, carry):
                r0 = pl.multiple_of(i * rc, rc)
                bp, ip, up = partials(x_ref[pl.ds(r0, rc), :],
                                      t_ref[pl.ds(r0, rc), :], masked)
                bce_ref[pl.ds(r0, rc), :] += bp
                inter_ref[pl.ds(r0, rc), :] += ip
                uni_ref[pl.ds(r0, rc), :] += up
                return carry

            lax.fori_loop(0, n_rc, row_chunk, 0)

    if ragged:
        crosses = col0 + td > d_valid      # true for at most one tile in the grid

        @pl.when(crosses)
        def _masked_tile():
            accumulate(True)

        @pl.when(jnp.logical_not(crosses))
        def _full_tile():
            accumulate(False)
    else:
        accumulate(False)


def bce_dice_loss(inputs, targets, *, bce_weight=BCE_WEIGHT,
                  dice_weight=DICE_WEIGHT, eps=EPS,
                  tile_bytes=2 * 1024 * 1024, num_core_splits=None,
                  approx_sigmoid=False):
    """inputs: (N, C, H, W) logits; targets: same shape, any dtype (keep labels
    narrow — bool / int8 / bf16 — for less HBM traffic; cast happens in-kernel).
    Returns the scalar f32 loss  bce_weight * BCEWithLogits + dice_weight * (1 - dice)."""
    if inputs.shape != targets.shape:
        raise ValueError("inputs and targets must have the same shape")
    N = inputs.shape[0]
    D = math.prod(inputs.shape[1:])

    # Fold part of D into rows so vreg sublanes are full even for tiny batches.
    S = _pick_sublane_fold(N, D)
    ROWS, Dr = N * S, D // S
    x2 = inputs.reshape(ROWS, Dr)
    t2 = targets.reshape(ROWS, Dr)        # native dtype; cast inside the kernel

    # Column tiling: ~tile_bytes per f32 input tile, cdiv grid, no wrapper pad.
    NC = (_default_num_core_splits() if num_core_splits is None
          else max(1, int(num_core_splits)))
    td_cap = max(LANE, (tile_bytes // (ROWS * 4)) // LANE * LANE)
    if ROWS % SUBLANE != 0 or ROWS <= SUBLANE:
        # Cannot row-chunk in-kernel -> bound the whole-tile elementwise temporaries.
        td_cap = min(td_cap, max(LANE, (_TEMP_BYTES // (ROWS * 4)) // LANE * LANE))
    TD = min(td_cap, _round_up(pl.cdiv(Dr, NC), LANE))
    KT = pl.cdiv(Dr, NC * TD)
    if NC > 1 and (NC * KT - 1) * TD >= Dr:
        # Degenerate split (a core would start past the data): single range.
        NC = 1
        TD = min(td_cap, _round_up(Dr, LANE))
        KT = pl.cdiv(Dr, TD)
    ragged = NC * KT * TD != Dr           # only the final tile can be ragged
    RC = _pick_row_chunk(ROWS, TD)

    kernel = functools.partial(
        _bce_dice_partial_kernel, kt=KT, td=TD, rc=RC, d_valid=Dr,
        ragged=ragged, approx_sigmoid=approx_sigmoid)

    acc_shape = jax.ShapeDtypeStruct((ROWS, NC * LANE), jnp.float32)
    cost = pl.CostEstimate(
        flops=12 * N * D,
        transcendentals=2 * N * D,
        bytes_accessed=int(x2.size * x2.dtype.itemsize
                           + t2.size * t2.dtype.itemsize
                           + 3 * ROWS * NC * LANE * 4))

    bce_acc, inter_acc, uni_acc = pl.pallas_call(
        kernel,
        out_shape=(acc_shape, acc_shape, acc_shape),
        grid=(NC, KT),
        in_specs=[
            pl.BlockSpec((ROWS, TD), lambda c, k: (0, c * KT + k)),
            pl.BlockSpec((ROWS, TD), lambda c, k: (0, c * KT + k)),
        ],
        out_specs=(
            pl.BlockSpec((ROWS, LANE), lambda c, k: (0, c)),
            pl.BlockSpec((ROWS, LANE), lambda c, k: (0, c)),
            pl.BlockSpec((ROWS, LANE), lambda c, k: (0, c)),
        ),
        compiler_params=pltpu.CompilerParams(
            dimension_semantics=("parallel", "arbitrary"),
            vmem_limit_bytes=_default_vmem_limit_bytes()),
        cost_estimate=cost,
    )(x2, t2)

    # Tiny O(ROWS * 128) combine of the per-row / per-core partials.
    bce_loss = jnp.sum(bce_acc) / float(N * D)
    inter_b = jnp.sum(inter_acc.reshape(N, -1), axis=1)
    union_b = jnp.sum(uni_acc.reshape(N, -1), axis=1)
    dice = (2.0 * inter_b + eps) / (union_b + eps)
    dice_loss = 1.0 - jnp.mean(dice)
    return bce_weight * bce_loss + dice_weight * dice_loss


def _reference(inputs, targets, *, bce_weight=BCE_WEIGHT,
               dice_weight=DICE_WEIGHT, eps=EPS):
    # Pure-JAX reference mirroring the PyTorch module.
    x = inputs.astype(jnp.float32)
    t = targets.astype(jnp.float32)
    bce = jnp.mean(jnp.maximum(x, 0.0) - x * t + jnp.log1p(jnp.exp(-jnp.abs(x))))
    s = jax.nn.sigmoid(x)
    axes = tuple(range(1, x.ndim))
    inter = jnp.sum(s * t, axis=axes)
    union = jnp.sum(s, axis=axes) + jnp.sum(t, axis=axes)
    dice = (2.0 * inter + eps) / (union + eps)
    return bce_weight * bce + dice_weight * (1.0 - jnp.mean(dice))


def _check(key, shape, **kwargs):
    k1, k2 = jax.random.split(key)
    logits = jax.random.normal(k1, shape, dtype=jnp.float32)
    labels = (jax.random.uniform(k2, shape) > 0.5).astype(jnp.float32)
    out = jax.block_until_ready(bce_dice_loss(logits, labels, **kwargs))
    ref = jax.block_until_ready(_reference(logits, labels))
    assert jnp.allclose(out, ref, atol=2e-5, rtol=2e-5), (shape, out, ref)


if __name__ == "__main__":
    key = jax.random.PRNGKey(0)
    k1, k2, k3 = jax.random.split(key, 3)

    # Shapes consistent with the UNet BCEDiceLoss usage: (N, C, H, W) logits.
    _check(k1, (2, 4, 16, 16))                            # lane-aligned fast path
    _check(k2, (2, 3, 5, 10))                             # ragged tail -> masked boundary tile
    _check(k3, (2, 4, 256, 256), tile_bytes=512 * 1024)   # multi-step pipeline + row-chunk loop

    print("KERNEL_OK")
</pallas_src>

<mosaic_0001>
module attributes {stable_mosaic.version = 11 : i64} {
  func.func @_bce_dice_partial_kernel(%arg0: i32, %arg1: i32, %arg2: memref<16x128xf32, #tpu.memory_space<vmem>>, %arg3: memref<16x128xf32, #tpu.memory_space<vmem>>, %arg4: memref<16x128xf32, #tpu.memory_space<vmem>>, %arg5: memref<16x128xf32, #tpu.memory_space<vmem>>, %arg6: memref<16x128xf32, #tpu.memory_space<vmem>>) attributes {dimension_semantics = [#tpu.dimension_semantics<parallel>, #tpu.dimension_semantics<arbitrary>], iteration_bounds = array<i64: 1, 1>, scalar_prefetch = 0 : i64, scratch_operands = 0 : i64, tpu.core_type = #tpu.core_type<tc>, window_params = [{transform_indices = @transform_0, window_bounds = array<i64: 16, 128>}, {transform_indices = @transform_1, window_bounds = array<i64: 16, 128>}, {transform_indices = @transform_2, window_bounds = array<i64: 16, 128>}, {transform_indices = @transform_3, window_bounds = array<i64: 16, 128>}, {transform_indices = @transform_4, window_bounds = array<i64: 16, 128>}]} {
    %c0_i32 = arith.constant 0 : i32
    %0 = arith.cmpi eq, %arg1, %c0_i32 : i32
    %1 = arith.extui %0 : i1 to i32
    %c0_i32_0 = arith.constant 0 : i32
    %2 = arith.cmpi ne, %1, %c0_i32_0 : i32
    scf.if %2 {
      %cst_20 = arith.constant 0.000000e+00 : f32
      %33 = vector.broadcast %cst_20 : f32 to vector<16x128xf32>
      %c0_21 = arith.constant 0 : index
      %c0_22 = arith.constant 0 : index
      %34 = vector.load %arg4[%c0_21, %c0_22] : memref<16x128xf32, #tpu.memory_space<vmem>>, vector<16x128xf32>
      tpu.vector_store %arg4[%c0_21, %c0_22], %33 {strides = array<i32>} : memref<16x128xf32, #tpu.memory_space<vmem>>, vector<16x128xf32>,
      %cst_23 = arith.constant 0.000000e+00 : f32
      %35 = vector.broadcast %cst_23 : f32 to vector<16x128xf32>
      %c0_24 = arith.constant 0 : index
      %c0_25 = arith.constant 0 : index
      %36 = vector.load %arg5[%c0_24, %c0_25] : memref<16x128xf32, #tpu.memory_space<vmem>>, vector<16x128xf32>
      tpu.vector_store %arg5[%c0_24, %c0_25], %35 {strides = array<i32>} : memref<16x128xf32, #tpu.memory_space<vmem>>, vector<16x128xf32>,
      %cst_26 = arith.constant 0.000000e+00 : f32
      %37 = vector.broadcast %cst_26 : f32 to vector<16x128xf32>
      %c0_27 = arith.constant 0 : index
      %c0_28 = arith.constant 0 : index
      %38 = vector.load %arg6[%c0_27, %c0_28] : memref<16x128xf32, #tpu.memory_space<vmem>>, vector<16x128xf32>
      tpu.vector_store %arg6[%c0_27, %c0_28], %37 {strides = array<i32>} : memref<16x128xf32, #tpu.memory_space<vmem>>, vector<16x128xf32>,
    } else {
    }
    %c0 = arith.constant 0 : index
    %c0_1 = arith.constant 0 : index
    %3 = vector.load %arg2[%c0, %c0_1] : memref<16x128xf32, #tpu.memory_space<vmem>>, vector<16x128xf32>
    %c0_2 = arith.constant 0 : index
    %c0_3 = arith.constant 0 : index
    %4 = vector.load %arg3[%c0_2, %c0_3] : memref<16x128xf32, #tpu.memory_space<vmem>>, vector<16x128xf32>
    %5 = math.absf %3 : vector<16x128xf32>
    %cst = arith.constant 0.000000e+00 : f32
    %6 = vector.broadcast %cst : f32 to vector<16x128xf32>
    %7 = arith.subf %6, %5 : vector<16x128xf32>
    %8 = math.exp %7 : vector<16x128xf32>
    %cst_4 = arith.constant 0.000000e+00 : f32
    %9 = vector.broadcast %cst_4 : f32 to vector<16x128xf32>
    %10 = arith.maximumf %3, %9 : vector<16x128xf32>
    %11 = arith.mulf %3, %4 : vector<16x128xf32>
    %12 = arith.subf %10, %11 : vector<16x128xf32>
    %13 = math.log1p %8 : vector<16x128xf32>
    %14 = arith.addf %12, %13 : vector<16x128xf32>
    %cst_5 = arith.constant 0.000000e+00 : f32
    %15 = vector.broadcast %cst_5 : f32 to vector<16x128xf32>
    %16 = arith.cmpf oge, %3, %15 : vector<16x128xf32>
    %cst_6 = arith.constant 1.000000e+00 : f32
    %17 = vector.broadcast %cst_6 : f32 to vector<16x128xf32>
    %18 = arith.select %16, %17, %8 : vector<16x128xi1>, vector<16x128xf32>
    %cst_7 = arith.constant 1.000000e+00 : f32
    %19 = vector.broadcast %cst_7 : f32 to vector<16x128xf32>
    %20 = arith.addf %19, %8 : vector<16x128xf32>
    %21 = arith.divf %18, %20 : vector<16x128xf32>
    %22 = arith.mulf %21, %4 : vector<16x128xf32>
    %23 = arith.addf %21, %4 : vector<16x128xf32>
    %c0_8 = arith.constant 0 : index
    %c0_9 = arith.constant 0 : index
    %24 = vector.load %arg4[%c0_8, %c0_9] : memref<16x128xf32, #tpu.memory_space<vmem>>, vector<16x128xf32>
    %25 = arith.addf %24, %14 : vector<16x128xf32>
    %c0_10 = arith.constant 0 : index
    %c0_11 = arith.constant 0 : index
    %26 = vector.load %arg4[%c0_10, %c0_11] : memref<16x128xf32, #tpu.memory_space<vmem>>, vector<16x128xf32>
    tpu.vector_store %arg4[%c0_10, %c0_11], %25 {strides = array<i32>} : memref<16x128xf32, #tpu.memory_space<vmem>>, vector<16x128xf32>,
    %c0_12 = arith.constant 0 : index
    %c0_13 = arith.constant 0 : index
    %27 = vector.load %arg5[%c0_12, %c0_13] : memref<16x128xf32, #tpu.memory_space<vmem>>, vector<16x128xf32>
    %28 = arith.addf %27, %22 : vector<16x128xf32>
    %c0_14 = arith.constant 0 : index
    %c0_15 = arith.constant 0 : index
    %29 = vector.load %arg5[%c0_14, %c0_15] : memref<16x128xf32, #tpu.memory_space<vmem>>, vector<16x128xf32>
    tpu.vector_store %arg5[%c0_14, %c0_15], %28 {strides = array<i32>} : memref<16x128xf32, #tpu.memory_space<vmem>>, vector<16x128xf32>,
    %c0_16 = arith.constant 0 : index
    %c0_17 = arith.constant 0 : index
    %30 = vector.load %arg6[%c0_16, %c0_17] : memref<16x128xf32, #tpu.memory_space<vmem>>, vector<16x128xf32>
    %31 = arith.addf %30, %23 : vector<16x128xf32>
    %c0_18 = arith.constant 0 : index
    %c0_19 = arith.constant 0 : index
    %32 = vector.load %arg6[%c0_18, %c0_19] : memref<16x128xf32, #tpu.memory_space<vmem>>, vector<16x128xf32>
    tpu.vector_store %arg6[%c0_18, %c0_19], %31 {strides = array<i32>} : memref<16x128xf32, #tpu.memory_space<vmem>>, vector<16x128xf32>,
    return
  }
  func.func @transform_0(%arg0: i32, %arg1: i32) -> (i32, i32) {
    %c1_i32 = arith.constant 1 : i32
    %0 = arith.muli %arg0, %c1_i32 : i32
    %1 = arith.addi %0, %arg1 : i32
    %c0_i32 = arith.constant 0 : i32
    %c0_i32_0 = arith.constant 0 : i32
    return %c0_i32, %1 : i32, i32
  }
  func.func @transform_1(%arg0: i32, %arg1: i32) -> (i32, i32) {
    %c1_i32 = arith.constant 1 : i32
    %0 = arith.muli %arg0, %c1_i32 : i32
    %1 = arith.addi %0, %arg1 : i32
    %c0_i32 = arith.constant 0 : i32
    %c0_i32_0 = arith.constant 0 : i32
    return %c0_i32, %1 : i32, i32
  }
  func.func @transform_2(%arg0: i32, %arg1: i32) -> (i32, i32) {
    %c0_i32 = arith.constant 0 : i32
    %c0_i32_0 = arith.constant 0 : i32
    return %c0_i32, %arg0 : i32, i32
  }
  func.func @transform_3(%arg0: i32, %arg1: i32) -> (i32, i32) {
    %c0_i32 = arith.constant 0 : i32
    %c0_i32_0 = arith.constant 0 : i32
    return %c0_i32, %arg0 : i32, i32
  }
  func.func @transform_4(%arg0: i32, %arg1: i32) -> (i32, i32) {
    %c0_i32 = arith.constant 0 : i32
    %c0_i32_0 = arith.constant 0 : i32
    return %c0_i32, %arg0 : i32, i32
  }
}

</mosaic_0001>

<llo_original>
// kernel: tpu_custom_call.1
$region0: #{tpu_custom_call.1}
  #allocation0 [shape = 'u32[]', space=smem, size = 0x4, offset = 0x4, fixed_abs, tag = 'smem constant byte address 0x4 - core index']
  #allocation1 [shape = 'u32[144,128]{1,0:T(1,128)}', space=vmem, size = 0x12000, scoped, tag = 'internal scratch']
  %s0 = inlined_call_operand.hbm [shape: f32[16,128], index: 0, kind: input, shape index: {}]
  %s1 = inlined_call_operand.hbm [shape: f32[16,128], index: 1, kind: input, shape index: {}]
  %s2 = inlined_call_operand.hbm [shape: f32[16,128], index: 2, kind: output, shape index: {0}]
  %s3 = inlined_call_operand.hbm [shape: f32[16,128], index: 3, kind: output, shape index: {1}]
  %s4 = inlined_call_operand.hbm [shape: f32[16,128], index: 4, kind: output, shape index: {2}]
  %5 = xla_tuple %s2, %s3, %s4
  %s6 = sld [smem:[#allocation0]]
  $region46: #{tpu_custom_call.1} parent=0
    _
  %s8 = ssub.s32 1, %s6
  %s9 = scalar_select 0, %s8, %s6
  $region1: #{tpu_custom_call.1} parent=0
    #allocation2 [shape = 'u8[8192]{0}', space=vmem, size = 0x2000, scoped, tag = 'input window, operand 0, single buffered']
    #allocation3 [shape = 's32[1]{0}', space=sflag, size = 0x4, scoped, tag = 'scoped memory for tpu_custom_call.1']
    #allocation4 [shape = 's32[1]{0}', space=sflag, size = 0x4, scoped, tag = 'scoped memory for tpu_custom_call.1']
    #allocation5 [shape = 'u8[8192]{0}', space=vmem, size = 0x2000, scoped, tag = 'input window, operand 1, single buffered']
    #allocation6 [shape = 's32[1]{0}', space=sflag, size = 0x4, scoped, tag = 'scoped memory for tpu_custom_call.1']
    #allocation7 [shape = 'u8[8192]{0}', space=vmem, size = 0x2000, scoped, tag = 'output window, operand 0, single buffered']
    #allocation8 [shape = 'u8[8192]{0}', space=vmem, size = 0x2000, scoped, tag = 'output window, operand 1, single buffered']
    #allocation9 [shape = 's32[1]{0}', space=sflag, size = 0x4, scoped, tag = 'scoped memory for tpu_custom_call.1']
    #allocation10 [shape = 'u8[8192]{0}', space=vmem, size = 0x2000, scoped, tag = 'output window, operand 2, single buffered']
    %10 = vsyncpa [#allocation3], 0
    %11 = vsyncpa [#allocation6], 0
    %12 = vsyncpa [#allocation4], 0
    %13 = vsyncpa [#allocation9], 0
    // Predicated region
    $region2: #{tpu_custom_call.1} parent=1 // pred_check
      _
    $region3: #{tpu_custom_call.1} parent=1 // pred_check_branch
      %15 = sbr.rel (0) target = $region5
    $region4: #{tpu_custom_call.1} parent=1 // pred_region
      %s16 = sadd.s32 0, 0
      %s18 = ssub.s32 256, 256
      %19 = vsyncadd [#allocation3], %s18
      %s20 = smul.addr %s16, 128
      %s21 = scalar_lea.hbm %s0, %s20
      %s22 = sshll.u32 [#allocation2], 4
      %s23 = int_to_ptr.vmem [resolvable:$true] %s22
      %28 = dma.hbm_to_vmem [thread:$0]  %s21, 256, %s23, [#allocation3], 128, 128, 8
    $region5: #{tpu_custom_call.1} parent=1 // pred_fallthru
      _
    // Predicated region
    $region6: #{tpu_custom_call.1} parent=1 // pred_check
      _
    $region7: #{tpu_custom_call.1} parent=1 // pred_check_branch
      %30 = sbr.rel (0) target = $region9
    $region8: #{tpu_custom_call.1} parent=1 // pred_region
      %s31 = sadd.s32 0, 0
      %s33 = ssub.s32 256, 256
      %34 = vsyncadd [#allocation6], %s33
      %s35 = smul.addr %s31, 128
      %s36 = scalar_lea.hbm %s1, %s35
      %s37 = sshll.u32 [#allocation5], 4
      %s38 = int_to_ptr.vmem [resolvable:$true] %s37
      %43 = dma.hbm_to_vmem [thread:$0]  %s36, 256, %s38, [#allocation6], 128, 128, 8
    $region9: #{tpu_custom_call.1} parent=1 // pred_fallthru
      _
    // Predicated region
    $region10: #{tpu_custom_call.1} parent=1 // pred_check
      _
    $region11: #{tpu_custom_call.1} parent=1 // pred_check_branch
      %45 = sbr.rel (0) target = $region13
    $region12: #{tpu_custom_call.1} parent=1 // pred_region
      %46 = dma.done [#allocation3], 256
    $region13: #{tpu_custom_call.1} parent=1 // pred_fallthru
      _
    // Predicated region
    $region14: #{tpu_custom_call.1} parent=1 // pred_check
      _
    $region15: #{tpu_custom_call.1} parent=1 // pred_check_branch
      %48 = sbr.rel (0) target = $region17
    $region16: #{tpu_custom_call.1} parent=1 // pred_region
      %49 = dma.done [#allocation6], 256
    $region17: #{tpu_custom_call.1} parent=1 // pred_fallthru
      _
    %s50 = sadd.s32 0, 0
    %s51 = sadd.s32 0, 0
    %p52 = scmp.eq.s32.totalorder 0, 0
    // Predicated region
    $region18: #{tpu_custom_call.1} parent=1 // pred_check
      %p53 = pneg %p52
    $region19: #{tpu_custom_call.1} parent=1 // pred_check_branch
      %55 = sbr.rel (%p53) target = $region21
    $region20: #{tpu_custom_call.1} parent=1 // pred_region
      %56 = vst [vmem:[#allocation7] sm:$0xff] 0.0
      %57 = vst [vmem:[#allocation7 + $0x8] sm:$0xff] 0.0
      %58 = vst [vmem:[#allocation8] sm:$0xff] 0.0
      %59 = vst [vmem:[#allocation8 + $0x8] sm:$0xff] 0.0
      %60 = vst [vmem:[#allocation10] sm:$0xff] 0.0
      %61 = vst [vmem:[#allocation10 + $0x8] sm:$0xff] 0.0
    $region21: #{tpu_custom_call.1} parent=1 // pred_fallthru
      _
    %v62 = vld [vmem:[#allocation2] sm:$0xff]
    %v63 = vld [vmem:[#allocation2 + $0x8] sm:$0xff]
    %v64 = vld [vmem:[#allocation5] sm:$0xff]
    %v65 = vld [vmem:[#allocation5 + $0x8] sm:$0xff]
    %v66 = vand.u32 2147483647, %v62
    %v67 = vand.u32 2147483647, %v63
    %v68 = vsub.f32 0.0, %v66
    %v69 = vsub.f32 0.0, %v67
    %v70 = vmul.f32 %v68, 1.442695
    %v71 = vpow.pop %v70
    %v72 = vmul.f32 %v69, 1.442695
    %v73 = vpow.pop %v72
    %v74 = vmax.f32 %v62, 0.0
    %v75 = vmax.f32 %v63, 0.0
    %v76 = vmul.f32 %v62, %v64
    %v77 = vmul.f32 %v63, %v65
    %v78 = vsub.f32 %v74, %v76
    %v79 = vsub.f32 %v75, %v77
    %v80 = vadd.f32 %v71, 1.0
    %v81 = vlog2.pop %v80
    %v82 = vmul.f32 %v81, 0.6931472
    %v83 = vmul.f32 -0.5, %v71
    %v84 = vadd.f32 %v83, 1.0
    %v85 = vmul.f32 %v84, %v71
    %v86 = vand.u32 2147483647, %v71
    %vm87 = vcmp.lt.f32.partialorder %v86, 0.0004427343
    %v88 = vsel %vm87, %v85, %v82
    %v89 = vadd.f32 %v73, 1.0
    %v90 = vlog2.pop %v89
    %v91 = vmul.f32 %v90, 0.6931472
    %v92 = vmul.f32 -0.5, %v73
    %v93 = vadd.f32 %v92, 1.0
    %v94 = vmul.f32 %v93, %v73
    %v95 = vand.u32 2147483647, %v73
    %vm96 = vcmp.lt.f32.partialorder %v95, 0.0004427343
    %v97 = vsel %vm96, %v94, %v91
    %v98 = vadd.f32 %v78, %v88
    %v99 = vadd.f32 %v79, %v97
    %vm100 = vcmp.ge.f32.partialorder %v62, 0.0
    %vm101 = vcmp.ge.f32.partialorder %v63, 0.0
    %v102 = vsel %vm100, 1.0, %v71
    %v103 = vsel %vm101, 1.0, %v73
    %v104 = vadd.f32 %v71, 1.0
    %v105 = vadd.f32 %v73, 1.0
    %v106 = vrcp.pop %v104
    %v107 = vmul.f32 %v102, %v106
    %v108 = vrcp.pop %v105
    %v109 = vmul.f32 %v103, %v108
    %v110 = vmul.f32 %v107, %v64
    %v111 = vmul.f32 %v109, %v65
    %v112 = vadd.f32 %v107, %v64
    %v113 = vadd.f32 %v109, %v65
    %v114 = vld [vmem:[#allocation7] sm:$0xff]
    %v115 = vld [vmem:[#allocation7 + $0x8] sm:$0xff]
    %v116 = vadd.f32 %v114, %v98
    %v117 = vadd.f32 %v115, %v99
    %118 = vst [vmem:[#allocation7] sm:$0xff] %v116
    %119 = vst [vmem:[#allocation7 + $0x8] sm:$0xff] %v117
    %v120 = vld [vmem:[#allocation8] sm:$0xff]
    %v121 = vld [vmem:[#allocation8 + $0x8] sm:$0xff]
    %v122 = vadd.f32 %v120, %v110
    %v123 = vadd.f32 %v121, %v111
    %124 = vst [vmem:[#allocation8] sm:$0xff] %v122
    %125 = vst [vmem:[#allocation8 + $0x8] sm:$0xff] %v123
    %v126 = vld [vmem:[#allocation10] sm:$0xff]
    %v127 = vld [vmem:[#allocation10 + $0x8] sm:$0xff]
    %v128 = vadd.f32 %v126, %v112
    %v129 = vadd.f32 %v127, %v113
    %130 = vst [vmem:[#allocation10] sm:$0xff] %v128
    %131 = vst [vmem:[#allocation10 + $0x8] sm:$0xff] %v129
    // Predicated region
    $region22: #{tpu_custom_call.1} parent=1 // pred_check
      _
    $region23: #{tpu_custom_call.1} parent=1 // pred_check_branch
      %133 = sbr.rel (0) target = $region25
    $region24: #{tpu_custom_call.1} parent=1 // pred_region
      %s135 = ssub.s32 256, 256
      %136 = vsyncadd [#allocation4], %s135
      %s137 = sshll.u32 [#allocation7], 4
      %s138 = int_to_ptr.vmem [resolvable:$true] %s137
      %143 = dma.vmem_to_hbm [thread:$0]  %s138, 256, %s2, [#allocation4], 128, 128, 8
    $region25: #{tpu_custom_call.1} parent=1 // pred_fallthru
      _
    // Predicated region
    $region26: #{tpu_custom_call.1} parent=1 // pred_check
      _
    $region27: #{tpu_custom_call.1} parent=1 // pred_check_branch
      %145 = sbr.rel (0) target = $region29
    $region28: #{tpu_custom_call.1} parent=1 // pred_region
      %s147 = ssub.s32 256, 256
      %148 = vsyncadd [#allocation9], %s147
      %s149 = sshll.u32 [#allocation8], 4
      %s150 = int_to_ptr.vmem [resolvable:$true] %s149
      %155 = dma.vmem_to_hbm [thread:$0]  %s150, 256, %s3, [#allocation9], 128, 128, 8
    $region29: #{tpu_custom_call.1} parent=1 // pred_fallthru
      _
    // Predicated region
    $region30: #{tpu_custom_call.1} parent=1 // pred_check
      _
    $region31: #{tpu_custom_call.1} parent=1 // pred_check_branch
      %157 = sbr.rel (0) target = $region33
    $region32: #{tpu_custom_call.1} parent=1 // pred_region
      %s159 = ssub.s32 256, 256
      %160 = vsyncadd [#allocation9], %s159
      %s161 = sshll.u32 [#allocation10], 4
      %s162 = int_to_ptr.vmem [resolvable:$true] %s161
      %167 = dma.vmem_to_hbm [thread:$0]  %s162, 256, %s4, [#allocation9], 128, 128, 8
    $region33: #{tpu_custom_call.1} parent=1 // pred_fallthru
      _
    // Predicated region
    $region34: #{tpu_custom_call.1} parent=1 // pred_check
      _
    $region35: #{tpu_custom_call.1} parent=1 // pred_check_branch
      %169 = sbr.rel (0) target = $region37
    $region36: #{tpu_custom_call.1} parent=1 // pred_region
      %170 = dma.done [#allocation4], 256
    $region37: #{tpu_custom_call.1} parent=1 // pred_fallthru
      _
    // Predicated region
    $region38: #{tpu_custom_call.1} parent=1 // pred_check
      _
    $region39: #{tpu_custom_call.1} parent=1 // pred_check_branch
      %172 = sbr.rel (0) target = $region41
    $region40: #{tpu_custom_call.1} parent=1 // pred_region
      %173 = dma.done [#allocation9], 256
    $region41: #{tpu_custom_call.1} parent=1 // pred_fallthru
      _
    // Predicated region
    $region42: #{tpu_custom_call.1} parent=1 // pred_check
      _
    $region43: #{tpu_custom_call.1} parent=1 // pred_check_branch
      %175 = sbr.rel (0) target = $region45
    $region44: #{tpu_custom_call.1} parent=1 // pred_region
      %176 = dma.done [#allocation9], 256
    $region45: #{tpu_custom_call.1} parent=1 // pred_fallthru
      _
    %177 = vsyncpa [#allocation3], 1
    %178 = vsyncpa [#allocation6], 1
    %179 = vsyncpa [#allocation4], 1
    %180 = vsyncpa [#allocation9], 1

</llo_original>
